<compile_context>
chip_gen: v7x
topology: tpu7x:2x2x1
jax: 0.10.0
libtpu: 0.0.40
codegen_flags: <defaults>
</compile_context>

<pallas_src>
import numpy as np
import jax
import jax.numpy as jnp
from jax.experimental import pallas as pl
from jax.experimental.pallas import tpu as pltpu


def _round_up(x, m):
    return (x + m - 1) // m * m


def _pick_tile(n_pad, cap=512):
    # n_pad is always a multiple of 128, so this terminates with >= 128.
    for t in (512, 256, 128):
        if t <= cap and n_pad % t == 0:
            return t
    return n_pad


# ---------------------------------------------------------------------------
# Pass 1 (conv1 fused): e = A_agg @ (fts @ W1 + b1)
# grid = (row tiles, K tiles); output e block stays resident across K.
# ---------------------------------------------------------------------------
def _conv1_agg_kernel(a_ref, fts_ref, w1_ref, b1_ref, e_ref):
    k = pl.program_id(1)

    @pl.when(k == 0)
    def _():
        e_ref[...] = jnp.zeros_like(e_ref)

    # Project the node rows feeding this K tile (tiny redundant recompute per
    # row block: O(N*Fin*Dh) total vs O(N^2*Dh) aggregation matmul).
    h = jnp.dot(fts_ref[...], w1_ref[...],
                preferred_element_type=jnp.float32) + b1_ref[...]
    e_ref[...] += jnp.dot(a_ref[...], h.astype(a_ref.dtype),
                          preferred_element_type=jnp.float32)


# ---------------------------------------------------------------------------
# Pass 2 (B_Broad=True): out_top = (alpha * e + A_e2n @ e) @ W2_pad + b2_pad
# ---------------------------------------------------------------------------
def _combine_classify_kernel(alpha_ref, e_row_ref, a_ref, e_red_ref,
                             w2_ref, b2_ref, out_ref, acc_ref):
    k = pl.program_id(1)
    nk = pl.num_programs(1)

    @pl.when(k == 0)
    def _():
        acc_ref[...] = alpha_ref[0] * e_row_ref[...]

    acc_ref[...] += jnp.dot(a_ref[...], e_red_ref[...].astype(a_ref.dtype),
                            preferred_element_type=jnp.float32)

    @pl.when(k == nk - 1)
    def _():
        out_ref[...] = jnp.dot(acc_ref[...], w2_ref[...],
                               preferred_element_type=jnp.float32) + b2_ref[...]


# Pass 2 (B_Broad=False): out_top = e @ W2_pad + b2_pad
def _classify_kernel(e_ref, w2_ref, b2_ref, out_ref):
    out_ref[...] = jnp.dot(e_ref[...], w2_ref[...],
                           preferred_element_type=jnp.float32) + b2_ref[...]


def dhgae_forward(fts, w1, b1, a_agg, a_e2n, w2, b2, alpha, *, b_broad=True,
                  compute_dtype=jnp.bfloat16):
    n, in_feats = fts.shape
    dh = w1.shape[1]
    nclass = w2.shape[1]
    f32 = jnp.float32

    n_pad = _round_up(n, 128)
    c_pad = _round_up(nclass, 128)
    tm = _pick_tile(n_pad)
    tk = _pick_tile(n_pad)
    nbm = n_pad // tm
    nbk = n_pad // tk

    # Pad N to a multiple of the tile size; cast the big operands to bf16.
    fts_p = jnp.zeros((n_pad, in_feats), compute_dtype).at[:n].set(
        fts.astype(compute_dtype))
    a_agg_p = jnp.zeros((n_pad, n_pad), compute_dtype).at[:n, :n].set(
        a_agg.astype(compute_dtype))
    a_e2n_p = jnp.zeros((n_pad, n_pad), compute_dtype).at[:n, :n].set(
        a_e2n.astype(compute_dtype))
    w1_c = w1.astype(compute_dtype)
    b1_f = b1.reshape(1, dh).astype(f32)
    # Lane-pad the classifier to 128 output lanes (unmasked stores).
    w2_p = jnp.zeros((dh, c_pad), f32).at[:, :nclass].set(w2.astype(f32))
    b2_p = jnp.zeros((1, c_pad), f32).at[:, :nclass].set(
        b2.reshape(1, nclass).astype(f32))
    alpha_f = alpha.reshape((1,)).astype(f32)

    # -------- pass 1: hyperedge embeddings e  [n_pad, dh] (f32) --------
    e = pl.pallas_call(
        _conv1_agg_kernel,
        out_shape=jax.ShapeDtypeStruct((n_pad, dh), f32),
        grid_spec=pltpu.PrefetchScalarGridSpec(
            num_scalar_prefetch=0,
            grid=(nbm, nbk),
            in_specs=[
                pl.BlockSpec((tm, tk), lambda i, k: (i, k)),        # A_agg
                pl.BlockSpec((tk, in_feats), lambda i, k: (k, 0)),  # fts rows
                pl.BlockSpec((in_feats, dh), lambda i, k: (0, 0)),  # W1
                pl.BlockSpec((1, dh), lambda i, k: (0, 0)),         # b1
            ],
            out_specs=pl.BlockSpec((tm, dh), lambda i, k: (i, 0)),
        ),
        compiler_params=pltpu.CompilerParams(
            dimension_semantics=("parallel", "arbitrary")),
    )(a_agg_p, fts_p, w1_c, b1_f)

    # -------- pass 2: combine + classifier (top half of the output) --------
    if b_broad:
        out_top_pad = pl.pallas_call(
            _combine_classify_kernel,
            out_shape=jax.ShapeDtypeStruct((n_pad, c_pad), f32),
            grid_spec=pltpu.PrefetchScalarGridSpec(
                num_scalar_prefetch=0,
                grid=(nbm, nbk),
                in_specs=[
                    pl.BlockSpec(memory_space=pltpu.MemorySpace.SMEM),  # alpha
                    pl.BlockSpec((tm, dh), lambda i, k: (i, 0)),    # e row block
                    pl.BlockSpec((tm, tk), lambda i, k: (i, k)),    # A_e2n
                    pl.BlockSpec((tk, dh), lambda i, k: (k, 0)),    # e (reduction)
                    pl.BlockSpec((dh, c_pad), lambda i, k: (0, 0)),  # W2 padded
                    pl.BlockSpec((1, c_pad), lambda i, k: (0, 0)),   # b2 padded
                ],
                out_specs=pl.BlockSpec((tm, c_pad), lambda i, k: (i, 0)),
                scratch_shapes=[pltpu.VMEM((tm, dh), f32)],
            ),
            compiler_params=pltpu.CompilerParams(
                dimension_semantics=("parallel", "arbitrary")),
        )(alpha_f, e, a_e2n_p, e, w2_p, b2_p)
    else:
        out_top_pad = pl.pallas_call(
            _classify_kernel,
            out_shape=jax.ShapeDtypeStruct((n_pad, c_pad), f32),
            grid_spec=pltpu.PrefetchScalarGridSpec(
                num_scalar_prefetch=0,
                grid=(nbm,),
                in_specs=[
                    pl.BlockSpec((tm, dh), lambda i: (i, 0)),
                    pl.BlockSpec((dh, c_pad), lambda i: (0, 0)),
                    pl.BlockSpec((1, c_pad), lambda i: (0, 0)),
                ],
                out_specs=pl.BlockSpec((tm, c_pad), lambda i: (i, 0)),
            ),
            compiler_params=pltpu.CompilerParams(
                dimension_semantics=("parallel",)),
        )(e, w2_p, b2_p)

    # Hyperedge entity rows (nums..2*nums-1) get no conv2 messages:
    # zeros @ W2 + b2 == broadcast(b2).  No [2N,64] concat / matmul needed.
    top = out_top_pad[:n, :nclass]
    bottom = jnp.broadcast_to(b2.reshape(1, nclass).astype(f32), (n, nclass))
    return jnp.concatenate([top, bottom], axis=0)


def _build_incidence(edge_index_n2e, nums, b_aggre):
    """Dense row-normalized (mean) aggregation matrices from edge lists."""
    e = edge_index_n2e.copy()
    e[1] = e[1] + nums                       # module: edge_index_nodetoedge[1] += nums
    if b_aggre:
        extra = np.stack([np.arange(nums), np.arange(nums) + nums])
        e = np.concatenate([e, extra], axis=1)

    # A_agg: hyperedge j (entity nums+j) mean-aggregates its incident nodes.
    a_agg = np.zeros((nums, nums), np.float32)
    for s, d in zip(e[0], e[1]):
        a_agg[d - nums, s] += 1.0
    a_agg = a_agg / np.maximum(a_agg.sum(axis=1, keepdims=True), 1.0)

    # A_e2n: transpose graph (edgetonode): node i mean-aggregates incident hyperedges.
    a_e2n = np.zeros((nums, nums), np.float32)
    for s, d in zip(e[1], e[0]):
        a_e2n[d, s - nums] += 1.0
    a_e2n = a_e2n / np.maximum(a_e2n.sum(axis=1, keepdims=True), 1.0)
    return jnp.asarray(a_agg), jnp.asarray(a_e2n)


if __name__ == "__main__":
    nums, in_feats, out_feats, nclass = 8, 32, 64, 4
    B_Aggre, B_Broad = True, True

    key = jax.random.PRNGKey(0)
    k1, k2, k3, k4, k5 = jax.random.split(key, 5)
    fts = jax.random.normal(k1, (nums, in_feats), jnp.float32)
    w1 = jax.random.normal(k2, (in_feats, out_feats), jnp.float32) * 0.1
    b1 = jax.random.normal(k3, (1, out_feats), jnp.float32) * 0.1
    w2 = jax.random.normal(k4, (out_feats, nclass), jnp.float32) * 0.1
    b2 = jax.random.normal(k5, (1, nclass), jnp.float32) * 0.1
    alpha = jnp.array([1.0], jnp.float32)        # nn.Parameter([1.0])

    # Deterministic synthetic hypergraph: node i belongs to hyperedges i and (i+1)%nums.
    src = np.concatenate([np.arange(nums), np.arange(nums)])
    dst = np.concatenate([np.arange(nums), (np.arange(nums) + 1) % nums])
    edge_index = np.stack([src, dst]).astype(np.int64)       # [2, E], node -> hyperedge-id

    a_agg, a_e2n = _build_incidence(edge_index, nums, B_Aggre)

    out = dhgae_forward(fts, w1, b1, a_agg, a_e2n, w2, b2, alpha, b_broad=B_Broad)
    out = jax.block_until_ready(out)

    # Plain-JAX f32 reference of the same forward for a sanity check.
    h = fts @ w1 + b1
    e_ref = a_agg @ h
    top = alpha[0] * e_ref + a_e2n @ e_ref if B_Broad else e_ref
    ref = jnp.concatenate([top, jnp.zeros_like(top)], axis=0) @ w2 + b2

    assert out.shape == (2 * nums, nclass)
    # bf16 incidence / feature matmuls with f32 accumulation -> ~1e-3 rel err.
    np.testing.assert_allclose(np.asarray(out), np.asarray(ref),
                               rtol=2e-2, atol=2e-2)
    print("KERNEL_OK")
</pallas_src>

<mosaic_0001>
module attributes {stable_mosaic.version = 11 : i64} {
  func.func @_conv1_agg_kernel(%arg0: i32, %arg1: i32, %arg2: memref<128x128xbf16, #tpu.memory_space<vmem>>, %arg3: memref<128x32xbf16, #tpu.memory_space<vmem>>, %arg4: memref<32x64xbf16, #tpu.memory_space<vmem>>, %arg5: memref<1x64xf32, #tpu.memory_space<vmem>>, %arg6: memref<128x64xf32, #tpu.memory_space<vmem>>) attributes {dimension_semantics = [#tpu.dimension_semantics<parallel>, #tpu.dimension_semantics<arbitrary>], iteration_bounds = array<i64: 1, 1>, scalar_prefetch = 0 : i64, scratch_operands = 0 : i64, tpu.core_type = #tpu.core_type<tc>, window_params = [{transform_indices = @transform_0, window_bounds = array<i64: 128, 128>}, {transform_indices = @transform_1, window_bounds = array<i64: 128, 32>}, {pipeline_mode = #tpu.pipeline_mode<synchronous>, transform_indices = @transform_2, window_bounds = array<i64: 32, 64>}, {pipeline_mode = #tpu.pipeline_mode<synchronous>, transform_indices = @transform_3, window_bounds = array<i64: 1, 64>}, {transform_indices = @transform_4, window_bounds = array<i64: 128, 64>}]} {
    %c0_i32 = arith.constant 0 : i32
    %0 = arith.cmpi eq, %arg1, %c0_i32 : i32
    %1 = arith.extui %0 : i1 to i32
    %c0_i32_0 = arith.constant 0 : i32
    %2 = arith.cmpi ne, %1, %c0_i32_0 : i32
    scf.if %2 {
      %cst_13 = arith.constant 0.000000e+00 : f32
      %15 = vector.broadcast %cst_13 : f32 to vector<128x64xf32>
      %c0_14 = arith.constant 0 : index
      %c0_15 = arith.constant 0 : index
      %16 = vector.load %arg6[%c0_14, %c0_15] : memref<128x64xf32, #tpu.memory_space<vmem>>, vector<128x64xf32>
      tpu.vector_store %arg6[%c0_14, %c0_15], %15 {strides = array<i32>} : memref<128x64xf32, #tpu.memory_space<vmem>>, vector<128x64xf32>,
    } else {
    }
    %c0 = arith.constant 0 : index
    %c0_1 = arith.constant 0 : index
    %3 = vector.load %arg3[%c0, %c0_1] : memref<128x32xbf16, #tpu.memory_space<vmem>>, vector<128x32xbf16>
    %c0_2 = arith.constant 0 : index
    %c0_3 = arith.constant 0 : index
    %4 = vector.load %arg4[%c0_2, %c0_3] : memref<32x64xbf16, #tpu.memory_space<vmem>>, vector<32x64xbf16>
    %cst = arith.constant dense<0.000000e+00> : vector<128x64xf32>
    %5 = tpu.matmul %3, %4, %cst {dimension_numbers = #tpu.dot_dimension_numbers<[1], [0], [0], [1], [0, 0, 1, 1], [], []>} : vector<128x32xbf16>, vector<32x64xbf16>, vector<128x64xf32> -> vector<128x64xf32>
    %c0_4 = arith.constant 0 : index
    %c0_5 = arith.constant 0 : index
    %6 = vector.load %arg5[%c0_4, %c0_5] : memref<1x64xf32, #tpu.memory_space<vmem>>, vector<1x64xf32>
    %7 = vector.broadcast %6 : vector<1x64xf32> to vector<128x64xf32>
    %8 = arith.addf %5, %7 : vector<128x64xf32>
    %c0_6 = arith.constant 0 : index
    %c0_7 = arith.constant 0 : index
    %9 = vector.load %arg6[%c0_6, %c0_7] : memref<128x64xf32, #tpu.memory_space<vmem>>, vector<128x64xf32>
    %c0_8 = arith.constant 0 : index
    %c0_9 = arith.constant 0 : index
    %10 = vector.load %arg2[%c0_8, %c0_9] : memref<128x128xbf16, #tpu.memory_space<vmem>>, vector<128x128xbf16>
    %11 = arith.truncf %8 : vector<128x64xf32> to vector<128x64xbf16>
    %cst_10 = arith.constant dense<0.000000e+00> : vector<128x64xf32>
    %12 = tpu.matmul %10, %11, %cst_10 {dimension_numbers = #tpu.dot_dimension_numbers<[1], [0], [0], [1], [0, 0, 1, 1], [], []>} : vector<128x128xbf16>, vector<128x64xbf16>, vector<128x64xf32> -> vector<128x64xf32>
    %13 = arith.addf %9, %12 : vector<128x64xf32>
    %c0_11 = arith.constant 0 : index
    %c0_12 = arith.constant 0 : index
    %14 = vector.load %arg6[%c0_11, %c0_12] : memref<128x64xf32, #tpu.memory_space<vmem>>, vector<128x64xf32>
    tpu.vector_store %arg6[%c0_11, %c0_12], %13 {strides = array<i32>} : memref<128x64xf32, #tpu.memory_space<vmem>>, vector<128x64xf32>,
    return
  }
  func.func @transform_0(%arg0: i32, %arg1: i32) -> (i32, i32) {
    %c0_i32 = arith.constant 0 : i32
    return %arg0, %arg1 : i32, i32
  }
  func.func @transform_1(%arg0: i32, %arg1: i32) -> (i32, i32) {
    %c0_i32 = arith.constant 0 : i32
    %c0_i32_0 = arith.constant 0 : i32
    return %arg1, %c0_i32 : i32, i32
  }
  func.func @transform_2(%arg0: i32, %arg1: i32) -> (i32, i32) {
    %c0_i32 = arith.constant 0 : i32
    %c0_i32_0 = arith.constant 0 : i32
    %c0_i32_1 = arith.constant 0 : i32
    return %c0_i32, %c0_i32_0 : i32, i32
  }
  func.func @transform_3(%arg0: i32, %arg1: i32) -> (i32, i32) {
    %c0_i32 = arith.constant 0 : i32
    %c0_i32_0 = arith.constant 0 : i32
    %c0_i32_1 = arith.constant 0 : i32
    return %c0_i32, %c0_i32_0 : i32, i32
  }
  func.func @transform_4(%arg0: i32, %arg1: i32) -> (i32, i32) {
    %c0_i32 = arith.constant 0 : i32
    %c0_i32_0 = arith.constant 0 : i32
    return %arg0, %c0_i32 : i32, i32
  }
}

</mosaic_0001>

<llo_original>
// kernel: tpu_custom_call.1
$region0: #{tpu_custom_call.1}
  #allocation0 [shape = 'u32[]', space=smem, size = 0x4, offset = 0x4, fixed_abs, tag = 'smem constant byte address 0x4 - core index']
  #allocation1 [shape = 'u32[144,128]{1,0:T(1,128)}', space=vmem, size = 0x12000, scoped, tag = 'internal scratch']
  %s0 = inlined_call_operand.vmem [shape: bf16[128,128], index: 0, kind: input, shape index: {}]
  %s1 = inlined_call_operand.vmem [shape: bf16[128,32], index: 1, kind: input, shape index: {}]
  %s2 = inlined_call_operand.vmem [shape: bf16[32,64], index: 2, kind: input, shape index: {}]
  %s3 = inlined_call_operand.vmem [shape: f32[1,64], index: 3, kind: input, shape index: {}]
  %s4 = inlined_call_operand.vmem [shape: f32[128,64], index: 4, kind: output, shape index: {}]
  %s5 = sld [smem:[#allocation0]]
  $region30: #{tpu_custom_call.1} parent=0
    _
  %s7 = ssub.s32 1, %s5
  %s8 = scalar_select 0, %s7, %s5
  // Predicated region
  $region2: #{tpu_custom_call.1} parent=0 // pred_check
    _
  $region3: #{tpu_custom_call.1} parent=0 // pred_check_branch
    %10 = sbr.rel (0) target = $region5
  $region4: #{tpu_custom_call.1} parent=0 // pred_region
    _
  $region5: #{tpu_custom_call.1} parent=0 // pred_fallthru
    _
  // Predicated region
  $region6: #{tpu_custom_call.1} parent=0 // pred_check
    _
  $region7: #{tpu_custom_call.1} parent=0 // pred_check_branch
    %12 = sbr.rel (0) target = $region9
  $region8: #{tpu_custom_call.1} parent=0 // pred_region
    _
  $region9: #{tpu_custom_call.1} parent=0 // pred_fallthru
    _
  // Predicated region
  $region10: #{tpu_custom_call.1} parent=0 // pred_check
    _
  $region11: #{tpu_custom_call.1} parent=0 // pred_check_branch
    %14 = sbr.rel (0) target = $region13
  $region12: #{tpu_custom_call.1} parent=0 // pred_region
    _
  $region13: #{tpu_custom_call.1} parent=0 // pred_fallthru
    _
  // Predicated region
  $region14: #{tpu_custom_call.1} parent=0 // pred_check
    _
  $region15: #{tpu_custom_call.1} parent=0 // pred_check_branch
    %16 = sbr.rel (0) target = $region17
  $region16: #{tpu_custom_call.1} parent=0 // pred_region
    _
  $region17: #{tpu_custom_call.1} parent=0 // pred_fallthru
    _
  %p18 = scmp.eq.s32.totalorder 0, 0
  // Predicated region
  $region18: #{tpu_custom_call.1} parent=0 // pred_check
    %p19 = pneg %p18
  $region19: #{tpu_custom_call.1} parent=0 // pred_check_branch
    %21 = sbr.rel (%p19) target = $region21
  $region20: #{tpu_custom_call.1} parent=0 // pred_region
    %vm22 = vcmask 523264
    %23 = vst.msk [vmem:[%s4] sm:$0xff] %vm22, 0.0
    %24 = vst.msk [vmem:[%s4 + $0x8] sm:$0xff] %vm22, 0.0
    %25 = vst.msk [vmem:[%s4 + $0x10] sm:$0xff] %vm22, 0.0
    %26 = vst.msk [vmem:[%s4 + $0x18] sm:$0xff] %vm22, 0.0
    %27 = vst.msk [vmem:[%s4 + $0x20] sm:$0xff] %vm22, 0.0
    %28 = vst.msk [vmem:[%s4 + $0x28] sm:$0xff] %vm22, 0.0
    %29 = vst.msk [vmem:[%s4 + $0x30] sm:$0xff] %vm22, 0.0
    %30 = vst.msk [vmem:[%s4 + $0x38] sm:$0xff] %vm22, 0.0
    %31 = vst.msk [vmem:[%s4 + $0x40] sm:$0xff] %vm22, 0.0
    %32 = vst.msk [vmem:[%s4 + $0x48] sm:$0xff] %vm22, 0.0
    %33 = vst.msk [vmem:[%s4 + $0x50] sm:$0xff] %vm22, 0.0
    %34 = vst.msk [vmem:[%s4 + $0x58] sm:$0xff] %vm22, 0.0
    %35 = vst.msk [vmem:[%s4 + $0x60] sm:$0xff] %vm22, 0.0
    %36 = vst.msk [vmem:[%s4 + $0x68] sm:$0xff] %vm22, 0.0
    %37 = vst.msk [vmem:[%s4 + $0x70] sm:$0xff] %vm22, 0.0
    %38 = vst.msk [vmem:[%s4 + $0x78] sm:$0xff] %vm22, 0.0
  $region21: #{tpu_custom_call.1} parent=0 // pred_fallthru
    _
  %v39 = vld [vmem:[%s1] sm:$0xf]
  %v40 = vld [vmem:[%s1 + $0x4] sm:$0xf]
  %v41 = vld [vmem:[%s1 + $0x8] sm:$0xf]
  %v42 = vld [vmem:[%s1 + $0xc] sm:$0xf]
  %v43 = vld [vmem:[%s1 + $0x10] sm:$0xf]
  %v44 = vld [vmem:[%s1 + $0x14] sm:$0xf]
  %v45 = vld [vmem:[%s1 + $0x18] sm:$0xf]
  %v46 = vld [vmem:[%s1 + $0x1c] sm:$0xf]
  %v47 = vld [vmem:[%s1 + $0x20] sm:$0xf]
  %v48 = vld [vmem:[%s1 + $0x24] sm:$0xf]
  %v49 = vld [vmem:[%s1 + $0x28] sm:$0xf]
  %v50 = vld [vmem:[%s1 + $0x2c] sm:$0xf]
  %v51 = vld [vmem:[%s1 + $0x30] sm:$0xf]
  %v52 = vld [vmem:[%s1 + $0x34] sm:$0xf]
  %v53 = vld [vmem:[%s1 + $0x38] sm:$0xf]
  %v54 = vld [vmem:[%s1 + $0x3c] sm:$0xf]
  %v55 = vld [vmem:[%s2] sm:$0xf]
  %v56 = vld [vmem:[%s2 + $0x4] sm:$0xf]
  %v57 = vld [vmem:[%s2 + $0x8] sm:$0xf]
  %v58 = vld [vmem:[%s2 + $0xc] sm:$0xf]
  %v59 = vld [vmem:[%s3] sm:$0x1]
  %v61 = vlaneseq
  %v62 = vshrl.u32 %v61, 7
  %v63 = vsub.s32 0, %v62
  %v64 = vrot.slane %v59, %v63
  %v82 = vunpack.c.l.b16 %v39
  %v83 = vunpack.c.l.b16 %v40
  %v84 = vunpack.c.l.b16 %v41
  %v85 = vunpack.c.l.b16 %v42
  %v86 = vunpack.c.l.b16 %v43
  %v87 = vunpack.c.l.b16 %v44
  %v88 = vunpack.c.l.b16 %v45
  %v89 = vunpack.c.l.b16 %v46
  %v90 = vunpack.c.l.b16 %v47
  %v91 = vunpack.c.l.b16 %v48
  %v92 = vunpack.c.l.b16 %v49
  %v93 = vunpack.c.l.b16 %v50
  %v94 = vunpack.c.l.b16 %v51
  %v95 = vunpack.c.l.b16 %v52
  %v96 = vunpack.c.l.b16 %v53
  %v97 = vunpack.c.l.b16 %v54
  %v98 = vpack.c.b16 %v83, %v82
  %v99 = vpack.c.b16 %v85, %v84
  %v100 = vpack.c.b16 %v87, %v86
  %v101 = vpack.c.b16 %v89, %v88
  %v102 = vpack.c.b16 %v91, %v90
  %v103 = vpack.c.b16 %v93, %v92
  %v104 = vpack.c.b16 %v95, %v94
  %v105 = vpack.c.b16 %v97, %v96
  %v110 = vunpack.c.l.b16 %v55
  %v111 = vunpack.c.l.b16 %v56
  %v112 = vunpack.c.l.b16 %v57
  %v113 = vunpack.c.l.b16 %v58
  %v114 = vpack.c.b16 %v111, %v110
  %v115 = vpack.c.b16 %v113, %v112
  %vm118 = vcmask 261120
  %v120 = vsel %vm118, %v98, 0
  %v123 = vsel %vm118, %v99, 0
  %v126 = vsel %vm118, %v100, 0
  %v129 = vsel %vm118, %v101, 0
  %v132 = vsel %vm118, %v102, 0
  %v135 = vsel %vm118, %v103, 0
  %v138 = vsel %vm118, %v104, 0
  %v141 = vsel %vm118, %v105, 0
  %143 = vmatprep.subr.bf16.mxu0 0
  %144 = vmatpush1.bf16.msra.mxu0 %v114
  %145 = vmatprep.subr.bf16.mxu0 0
  %146 = vmatpush1.bf16.msra.mxu0 %v115
  %147 = vmatprep.subr.bf16.mxu0 0
  %148 = vmatpush1.bf16.msra.mxu0 0
  %149 = vmatprep.subr.bf16.mxu0 0
  %150 = vmatpush1.bf16.msra.mxu0 0
  %151 = vmatprep.subr.bf16.mxu0 0
  %152 = vmatpush1.bf16.msra.mxu0 0
  %153 = vmatprep.subr.bf16.mxu0 0
  %154 = vmatpush1.bf16.msra.mxu0 0
  %155 = vmatprep.subr.bf16.mxu0 0
  %156 = vmatpush1.bf16.msra.mxu0 0
  %157 = vmatprep.subr.bf16.mxu0 0
  %158 = vmatpush1.bf16.msra.mxu0 0
  %159 = vmatprep.subr.bf16.mxu0 0
  %160 = vmatpush1.bf16.msra.mxu0 0
  %161 = vmatprep.subr.bf16.mxu0 0
  %162 = vmatpush1.bf16.msra.mxu0 0
  %163 = vmatprep.subr.bf16.mxu0 0
  %164 = vmatpush1.bf16.msra.mxu0 0
  %165 = vmatprep.subr.bf16.mxu0 0
  %166 = vmatpush1.bf16.msra.mxu0 0
  %167 = vmatprep.subr.bf16.mxu0 0
  %168 = vmatpush1.bf16.msra.mxu0 0
  %169 = vmatprep.subr.bf16.mxu0 0
  %170 = vmatpush1.bf16.msra.mxu0 0
  %171 = vmatprep.subr.bf16.mxu0 0
  %172 = vmatpush1.bf16.msra.mxu0 0
  %173 = vmatprep.subr.bf16.mxu0 0
  %174 = vmatpush1.bf16.msra.mxu0 0
  %175 = vmatprep.mubr.bf16.mxu0 0
  %176 = vmatmul.mubr.bf16.gmra.mrb[0].mxu0 %v120
  %v177 = vpop.f32.mrb[0].mxu0
  %v178 = vadd.f32 %v64, %v177
  %v179 = vpop.f32.mrb[0].mxu0
  %v180 = vpop.f32.mrb[0].mxu0
  %v181 = vadd.f32 %v64, %v180
  %v182 = vpop.f32.mrb[0].mxu0
  %183 = vmatprep.mubr.bf16.mxu0 0
  %184 = vmatmul.mubr.bf16.gmra.mrb[0].mxu0 %v123
  %v185 = vpop.f32.mrb[0].mxu0
  %v186 = vadd.f32 %v64, %v185
  %v187 = vpop.f32.mrb[0].mxu0
  %v188 = vpop.f32.mrb[0].mxu0
  %v189 = vadd.f32 %v64, %v188
  %v190 = vpop.f32.mrb[0].mxu0
  %191 = vmatprep.mubr.bf16.mxu0 0
  %192 = vmatmul.mubr.bf16.gmra.mrb[0].mxu0 %v126
  %v193 = vpop.f32.mrb[0].mxu0
  %v194 = vadd.f32 %v64, %v193
  %v195 = vpop.f32.mrb[0].mxu0
  %v196 = vpop.f32.mrb[0].mxu0
  %v197 = vadd.f32 %v64, %v196
  %v198 = vpop.f32.mrb[0].mxu0
  %199 = vmatprep.mubr.bf16.mxu0 0
  %200 = vmatmul.mubr.bf16.gmra.mrb[0].mxu0 %v129
  %v201 = vpop.f32.mrb[0].mxu0
  %v202 = vadd.f32 %v64, %v201
  %v203 = vpop.f32.mrb[0].mxu0
  %v204 = vpop.f32.mrb[0].mxu0
  %v205 = vadd.f32 %v64, %v204
  %v206 = vpop.f32.mrb[0].mxu0
  %207 = vmatprep.mubr.bf16.mxu0 0
  %208 = vmatmul.mubr.bf16.gmra.mrb[0].mxu0 %v132
  %v209 = vpop.f32.mrb[0].mxu0
  %v210 = vadd.f32 %v64, %v209
  %v211 = vpop.f32.mrb[0].mxu0
  %v212 = vpop.f32.mrb[0].mxu0
  %v213 = vadd.f32 %v64, %v212
  %v214 = vpop.f32.mrb[0].mxu0
  %215 = vmatprep.mubr.bf16.mxu0 0
  %216 = vmatmul.mubr.bf16.gmra.mrb[0].mxu0 %v135
  %v217 = vpop.f32.mrb[0].mxu0
  %v218 = vadd.f32 %v64, %v217
  %v219 = vpop.f32.mrb[0].mxu0
  %v220 = vpop.f32.mrb[0].mxu0
  %v221 = vadd.f32 %v64, %v220
  %v222 = vpop.f32.mrb[0].mxu0
  %223 = vmatprep.mubr.bf16.mxu0 0
  %224 = vmatmul.mubr.bf16.gmra.mrb[0].mxu0 %v138
  %v225 = vpop.f32.mrb[0].mxu0
  %v226 = vadd.f32 %v64, %v225
  %v227 = vpop.f32.mrb[0].mxu0
  %v228 = vpop.f32.mrb[0].mxu0
  %v229 = vadd.f32 %v64, %v228
  %v230 = vpop.f32.mrb[0].mxu0
  %231 = vmatprep.mubr.bf16.mxu0 0
  %232 = vmatmul.mubr.bf16.gmra.mrb[0].mxu0 %v141
  %v233 = vpop.f32.mrb[0].mxu0
  %v234 = vadd.f32 %v64, %v233
  %v235 = vpop.f32.mrb[0].mxu0
  %v236 = vpop.f32.mrb[0].mxu0
  %v237 = vadd.f32 %v64, %v236
  %v238 = vpop.f32.mrb[0].mxu0
  %239 = vdwg.mxu0
  %v240 = vld [vmem:[%s4] sm:$0xff]
  %v241 = vld [vmem:[%s4 + $0x8] sm:$0xff]
  %v242 = vld [vmem:[%s4 + $0x10] sm:$0xff]
  %v243 = vld [vmem:[%s4 + $0x18] sm:$0xff]
  %v244 = vld [vmem:[%s4 + $0x20] sm:$0xff]
  %v245 = vld [vmem:[%s4 + $0x28] sm:$0xff]
  %v246 = vld [vmem:[%s4 + $0x30] sm:$0xff]
  %v247 = vld [vmem:[%s4 + $0x38] sm:$0xff]
  %v248 = vld [vmem:[%s4 + $0x40] sm:$0xff]
  %v249 = vld [vmem:[%s4 + $0x48] sm:$0xff]
  %v250 = vld [vmem:[%s4 + $0x50] sm:$0xff]
  %v251 = vld [vmem:[%s4 + $0x58] sm:$0xff]
  %v252 = vld [vmem:[%s4 + $0x60] sm:$0xff]
  %v253 = vld [vmem:[%s4 + $0x68] sm:$0xff]
  %v254 = vld [vmem:[%s4 + $0x70] sm:$0xff]
  %v255 = vld [vmem:[%s4 + $0x78] sm:$0xff]
  %v256 = vld [vmem:[%s0] sm:$0xf]
  %v257 = vld [vmem:[%s0 + $0x4] sm:$0xf]
  %v258 = vld [vmem:[%s0 + $0x8] sm:$0xf]
  %v259 = vld [vmem:[%s0 + $0xc] sm:$0xf]
  %v260 = vld [vmem:[%s0 + $0x10] sm:$0xf]
  %v261 = vld [vmem:[%s0 + $0x14] sm:$0xf]
  %v262 = vld [vmem:[%s0 + $0x18] sm:$0xf]
  %v263 = vld [vmem:[%s0 + $0x1c] sm:$0xf]
  %v264 = vld [vmem:[%s0 + $0x20] sm:$0xf]
  %v265 = vld [vmem:[%s0 + $0x24] sm:$0xf]
  %v266 = vld [vmem:[%s0 + $0x28] sm:$0xf]
  %v267 = vld [vmem:[%s0 + $0x2c] sm:$0xf]
  %v268 = vld [vmem:[%s0 + $0x30] sm:$0xf]
  %v269 = vld [vmem:[%s0 + $0x34] sm:$0xf]
  %v270 = vld [vmem:[%s0 + $0x38] sm:$0xf]
  %v271 = vld [vmem:[%s0 + $0x3c] sm:$0xf]
  %v272 = vpack.c.bf16 %v181, %v178
  %v273 = vpack.c.bf16 %v189, %v186
  %v274 = vpack.c.bf16 %v197, %v194
  %v275 = vpack.c.bf16 %v205, %v202
  %v276 = vpack.c.bf16 %v213, %v210
  %v277 = vpack.c.bf16 %v221, %v218
  %v278 = vpack.c.bf16 %v229, %v226
  %v279 = vpack.c.bf16 %v237, %v234
  %v296 = vunpack.c.l.b16 %v256
  %v297 = vunpack.c.l.b16 %v257
  %v298 = vunpack.c.l.b16 %v258
  %v299 = vunpack.c.l.b16 %v259
  %v300 = vunpack.c.l.b16 %v260
  %v301 = vunpack.c.l.b16 %v261
  %v302 = vunpack.c.l.b16 %v262
  %v303 = vunpack.c.l.b16 %v263
  %v304 = vunpack.c.l.b16 %v264
  %v305 = vunpack.c.l.b16 %v265
  %v306 = vunpack.c.l.b16 %v266
  %v307 = vunpack.c.l.b16 %v267
  %v308 = vunpack.c.l.b16 %v268
  %v309 = vunpack.c.l.b16 %v269
  %v310 = vunpack.c.l.b16 %v270
  %v311 = vunpack.c.l.b16 %v271
  %v312 = vpack.c.b16 %v297, %v296
  %v313 = vpack.c.b16 %v299, %v298
  %v314 = vpack.c.b16 %v301, %v300
  %v315 = vpack.c.b16 %v303, %v302
  %v316 = vpack.c.b16 %v305, %v304
  %v317 = vpack.c.b16 %v307, %v306
  %v318 = vpack.c.b16 %v309, %v308
  %v319 = vpack.c.b16 %v311, %v310
  %328 = vmatprep.subr.bf16.mxu0 0
  %329 = vmatpush1.bf16.msra.mxu0 %v272
  %330 = vmatprep.subr.bf16.mxu0 0
  %331 = vmatpush1.bf16.msra.mxu0 %v273
  %332 = vmatprep.subr.bf16.mxu0 0
  %333 = vmatpush1.bf16.msra.mxu0 %v274
  %334 = vmatprep.subr.bf16.mxu0 0
  %335 = vmatpush1.bf16.msra.mxu0 %v275
  %336 = vmatprep.subr.bf16.mxu0 0
  %337 = vmatpush1.bf16.msra.mxu0 %v276
  %338 = vmatprep.subr.bf16.mxu0 0
  %339 = vmatpush1.bf16.msra.mxu0 %v277
  %340 = vmatprep.subr.bf16.mxu0 0
  %341 = vmatpush1.bf16.msra.mxu0 %v278
  %342 = vmatprep.subr.bf16.mxu0 0
  %343 = vmatpush1.bf16.msra.mxu0 %v279
  %344 = vmatprep.subr.bf16.mxu0 0
  %345 = vmatpush1.bf16.msra.mxu0 0
  %346 = vmatprep.subr.bf16.mxu0 0
  %347 = vmatpush1.bf16.msra.mxu0 0
  %348 = vmatprep.subr.bf16.mxu0 0
  %349 = vmatpush1.bf16.msra.mxu0 0
  %350 = vmatprep.subr.bf16.mxu0 0
  %351 = vmatpush1.bf16.msra.mxu0 0
  %352 = vmatprep.subr.bf16.mxu0 0
  %353 = vmatpush1.bf16.msra.mxu0 0
  %354 = vmatprep.subr.bf16.mxu0 0
  %355 = vmatpush1.bf16.msra.mxu0 0
  %356 = vmatprep.subr.bf16.mxu0 0
  %357 = vmatpush1.bf16.msra.mxu0 0
  %358 = vmatprep.subr.bf16.mxu0 0
  %359 = vmatpush1.bf16.msra.mxu0 0
  %360 = vmatprep.mubr.bf16.mxu0 0
  %361 = vmatmul.mubr.bf16.gmra.mrb[0].mxu0 %v312
  %v362 = vpop.f32.mrb[0].mxu0
  %v363 = vadd.f32 0.0, %v362
  %v364 = vpop.f32.mrb[0].mxu0
  %v365 = vpop.f32.mrb[0].mxu0
  %v366 = vadd.f32 0.0, %v365
  %v367 = vpop.f32.mrb[0].mxu0
  %368 = vmatprep.mubr.bf16.mxu0 0
  %369 = vmatmul.mubr.bf16.gmra.mrb[0].mxu0 %v313
  %v370 = vpop.f32.mrb[0].mxu0
  %v371 = vadd.f32 0.0, %v370
  %v372 = vpop.f32.mrb[0].mxu0
  %v373 = vpop.f32.mrb[0].mxu0
  %v374 = vadd.f32 0.0, %v373
  %v375 = vpop.f32.mrb[0].mxu0
  %376 = vmatprep.mubr.bf16.mxu0 0
  %377 = vmatmul.mubr.bf16.gmra.mrb[0].mxu0 %v314
  %v378 = vpop.f32.mrb[0].mxu0
  %v379 = vadd.f32 0.0, %v378
  %v380 = vpop.f32.mrb[0].mxu0
  %v381 = vpop.f32.mrb[0].mxu0
  %v382 = vadd.f32 0.0, %v381
  %v383 = vpop.f32.mrb[0].mxu0
  %384 = vmatprep.mubr.bf16.mxu0 0
  %385 = vmatmul.mubr.bf16.gmra.mrb[0].mxu0 %v315
  %v386 = vpop.f32.mrb[0].mxu0
  %v387 = vadd.f32 0.0, %v386
  %v388 = vpop.f32.mrb[0].mxu0
  %v389 = vpop.f32.mrb[0].mxu0
  %v390 = vadd.f32 0.0, %v389
  %v391 = vpop.f32.mrb[0].mxu0
  %392 = vmatprep.mubr.bf16.mxu0 0
  %393 = vmatmul.mubr.bf16.gmra.mrb[0].mxu0 %v316
  %v394 = vpop.f32.mrb[0].mxu0
  %v395 = vadd.f32 0.0, %v394
  %v396 = vpop.f32.mrb[0].mxu0
  %v397 = vpop.f32.mrb[0].mxu0
  %v398 = vadd.f32 0.0, %v397
  %v399 = vpop.f32.mrb[0].mxu0
  %400 = vmatprep.mubr.bf16.mxu0 0
  %401 = vmatmul.mubr.bf16.gmra.mrb[0].mxu0 %v317
  %v402 = vpop.f32.mrb[0].mxu0
  %v403 = vadd.f32 0.0, %v402
  %v404 = vpop.f32.mrb[0].mxu0
  %v405 = vpop.f32.mrb[0].mxu0
  %v406 = vadd.f32 0.0, %v405
  %v407 = vpop.f32.mrb[0].mxu0
  %408 = vmatprep.mubr.bf16.mxu0 0
  %409 = vmatmul.mubr.bf16.gmra.mrb[0].mxu0 %v318
  %v410 = vpop.f32.mrb[0].mxu0
  %v411 = vadd.f32 0.0, %v410
  %v412 = vpop.f32.mrb[0].mxu0
  %v413 = vpop.f32.mrb[0].mxu0
  %v414 = vadd.f32 0.0, %v413
  %v415 = vpop.f32.mrb[0].mxu0
  %416 = vmatprep.mubr.bf16.mxu0 0
  %417 = vmatmul.mubr.bf16.gmra.mrb[0].mxu0 %v319
  %v418 = vpop.f32.mrb[0].mxu0
  %v419 = vadd.f32 0.0, %v418
  %v420 = vpop.f32.mrb[0].mxu0
  %v421 = vpop.f32.mrb[0].mxu0
  %v422 = vadd.f32 0.0, %v421
  %v423 = vpop.f32.mrb[0].mxu0
  %424 = vdwg.mxu0
  %v425 = vadd.f32 %v240, %v363
  %v426 = vadd.f32 %v241, %v366
  %v427 = vadd.f32 %v242, %v371
  %v428 = vadd.f32 %v243, %v374
  %v429 = vadd.f32 %v244, %v379
  %v430 = vadd.f32 %v245, %v382
  %v431 = vadd.f32 %v246, %v387
  %v432 = vadd.f32 %v247, %v390
  %v433 = vadd.f32 %v248, %v395
  %v434 = vadd.f32 %v249, %v398
  %v435 = vadd.f32 %v250, %v403
  %v436 = vadd.f32 %v251, %v406
  %v437 = vadd.f32 %v252, %v411
  %v438 = vadd.f32 %v253, %v414
  %v439 = vadd.f32 %v254, %v419
  %v440 = vadd.f32 %v255, %v422
  %vm441 = vcmask 523264
  %442 = vst.msk [vmem:[%s4] sm:$0xff] %vm441, %v425
  %443 = vst.msk [vmem:[%s4 + $0x8] sm:$0xff] %vm441, %v426
  %444 = vst.msk [vmem:[%s4 + $0x10] sm:$0xff] %vm441, %v427
  %445 = vst.msk [vmem:[%s4 + $0x18] sm:$0xff] %vm441, %v428
  %446 = vst.msk [vmem:[%s4 + $0x20] sm:$0xff] %vm441, %v429
  %447 = vst.msk [vmem:[%s4 + $0x28] sm:$0xff] %vm441, %v430
  %448 = vst.msk [vmem:[%s4 + $0x30] sm:$0xff] %vm441, %v431
  %449 = vst.msk [vmem:[%s4 + $0x38] sm:$0xff] %vm441, %v432
  %450 = vst.msk [vmem:[%s4 + $0x40] sm:$0xff] %vm441, %v433
  %451 = vst.msk [vmem:[%s4 + $0x48] sm:$0xff] %vm441, %v434
  %452 = vst.msk [vmem:[%s4 + $0x50] sm:$0xff] %vm441, %v435
  %453 = vst.msk [vmem:[%s4 + $0x58] sm:$0xff] %vm441, %v436
  %454 = vst.msk [vmem:[%s4 + $0x60] sm:$0xff] %vm441, %v437
  %455 = vst.msk [vmem:[%s4 + $0x68] sm:$0xff] %vm441, %v438
  %456 = vst.msk [vmem:[%s4 + $0x70] sm:$0xff] %vm441, %v439
  %457 = vst.msk [vmem:[%s4 + $0x78] sm:$0xff] %vm441, %v440
  // Predicated region
  $region22: #{tpu_custom_call.1} parent=0 // pred_check
    _
  $region23: #{tpu_custom_call.1} parent=0 // pred_check_branch
    %459 = sbr.rel (0) target = $region25
  $region24: #{tpu_custom_call.1} parent=0 // pred_region
    _
  $region25: #{tpu_custom_call.1} parent=0 // pred_fallthru
    _
  // Predicated region
  $region26: #{tpu_custom_call.1} parent=0 // pred_check
    _
  $region27: #{tpu_custom_call.1} parent=0 // pred_check_branch
    %461 = sbr.rel (0) target = $region29
  $region28: #{tpu_custom_call.1} parent=0 // pred_region
    _
  $region29: #{tpu_custom_call.1} parent=0 // pred_fallthru
    _

</llo_original>
